<compile_context>
chip_gen: v7x
topology: tpu7x:2x2x1
jax: 0.10.0
libtpu: 0.0.40
codegen_flags: <defaults>
</compile_context>

<pallas_src>
import functools

import jax
import jax.numpy as jnp
from jax.experimental import pallas as pl
from jax.experimental.pallas import tpu as pltpu


# ---------------------------------------------------------------------------
# Projection kernel: xw = x @ W  (one wide matmul, K tiled, f32 accumulation)
# ---------------------------------------------------------------------------
def _proj_kernel(x_ref, w_ref, o_ref):
    k = pl.program_id(0)

    @pl.when(k == 0)
    def _():
        o_ref[...] = jnp.zeros_like(o_ref)

    o_ref[...] += jnp.dot(
        x_ref[...].astype(jnp.bfloat16),
        w_ref[...].astype(jnp.bfloat16),
        preferred_element_type=jnp.float32,
    )


def _project(x, w):
    """x:[M,K] @ w:[K,Nout] -> [M,Nout] float32, K-tiled on the MXU."""
    m, k = x.shape
    _, nout = w.shape
    tk = k if k <= 512 else 256
    assert k % tk == 0
    return pl.pallas_call(
        _proj_kernel,
        out_shape=jax.ShapeDtypeStruct((m, nout), jnp.float32),
        grid=(k // tk,),
        in_specs=[
            pl.BlockSpec((m, tk), lambda kk: (0, kk)),
            pl.BlockSpec((tk, nout), lambda kk: (kk, 0)),
        ],
        out_specs=pl.BlockSpec((m, nout), lambda kk: (0, 0)),
        compiler_params=pltpu.CompilerParams(
            dimension_semantics=("arbitrary",)),
    )(x, w)


# ---------------------------------------------------------------------------
# Attention + aggregation kernel (one head x one row-tile per grid step)
# ---------------------------------------------------------------------------
def _gat_attn_kernel(xw_ref, adj_ref, asrc_ref, adst_ref, bias_ref,
                     out_ref, asrc_row_ref, *, negative_slope, apply_elu, tm):
    r = pl.program_id(1)

    a_src = asrc_ref[0]                                             # (1, D)
    a_dst = adst_ref[0]                                             # (1, D)

    # alpha_src for every source node: compute once per head (r == 0) and keep
    # it lane-major as a (1, N) row in VMEM scratch for all row tiles.
    @pl.when(r == 0)
    def _():
        xw_all = xw_ref[...]                                        # (N, D)
        a = jnp.sum(xw_all * a_src, axis=-1, keepdims=True)         # (N, 1)
        asrc_row_ref[...] = jnp.transpose(a)                        # (1, N)

    row0 = pl.multiple_of(r * tm, tm)
    xw_rows = xw_ref[pl.ds(row0, tm), :]                            # (TM, D)
    alpha_dst = jnp.sum(xw_rows * a_dst, axis=-1, keepdims=True)    # (TM, 1)

    # scores[i, j] = leaky_relu(alpha_dst[i] + alpha_src[j]) for edge j -> i
    s = alpha_dst + asrc_row_ref[...]                               # (TM, N)
    s = jnp.where(s > 0, s, negative_slope * s)
    adj = adj_ref[...].astype(jnp.float32)                          # int8 -> f32 mask
    s = jnp.where(adj > 0.0, s, -1e30)

    # masked softmax over incoming edges (kept in f32)
    m = jnp.max(s, axis=-1, keepdims=True)
    p = jnp.exp(s - m)
    l = jnp.sum(p, axis=-1, keepdims=True)
    attn = p * pl.reciprocal(l, approx=True)
    # TODO(synk): dropout(p=0.6) on `attn` is training-only; inference path skips it.

    out = jnp.dot(attn.astype(jnp.bfloat16),
                  xw_ref[...].astype(jnp.bfloat16),
                  preferred_element_type=jnp.float32)               # (TM, D)
    out = out + bias_ref[0]
    if apply_elu:
        out = jnp.where(out > 0, out, jnp.expm1(out))               # F.elu, alpha=1
    out_ref[...] = out.astype(out_ref.dtype)


def gat_conv(x, adj_i8, w, att_src, att_dst, bias, *, heads, out_dim,
             negative_slope=0.2, apply_elu=False):
    """One GATConv layer (concat=True). Returns [N, heads * out_dim]."""
    n, fin = x.shape
    d = out_dim

    # Pad per-head output width to a multiple of 128 so matmul outputs and the
    # final stores are full-lane dense; padded columns are zero so results match.
    d_pad = ((d + 127) // 128) * 128
    if d_pad != d:
        pad = d_pad - d
        w = jnp.pad(w.reshape(fin, heads, d),
                    ((0, 0), (0, 0), (0, pad))).reshape(fin, heads * d_pad)
        att_src = jnp.pad(att_src, ((0, 0), (0, pad)))
        att_dst = jnp.pad(att_dst, ((0, 0), (0, pad)))
        bias = jnp.pad(bias, ((0, 0), (0, pad)))

    # Fused wide projection for all heads at once: (N, Fin) @ (Fin, H*Dpad).
    xw = _project(x, w)                                             # (N, H*Dpad) f32

    tm = n if n <= 128 else 128                                     # target-row tile
    assert n % tm == 0

    kernel = functools.partial(_gat_attn_kernel,
                               negative_slope=negative_slope,
                               apply_elu=apply_elu, tm=tm)
    out = pl.pallas_call(
        kernel,
        out_shape=jax.ShapeDtypeStruct((n, heads * d_pad), jnp.float32),
        grid=(heads, n // tm),
        in_specs=[
            pl.BlockSpec((n, d_pad), lambda h, r: (0, h)),          # xw head slice (all sources)
            pl.BlockSpec((tm, n), lambda h, r: (r, 0)),             # adjacency rows (int8)
            pl.BlockSpec((1, 1, d_pad), lambda h, r: (h, 0, 0)),    # att_src[h]
            pl.BlockSpec((1, 1, d_pad), lambda h, r: (h, 0, 0)),    # att_dst[h]
            pl.BlockSpec((1, 1, d_pad), lambda h, r: (h, 0, 0)),    # bias[h]
        ],
        # Written directly in PyG concat layout [N, H*Dpad] (lane-dense stores).
        out_specs=pl.BlockSpec((tm, d_pad), lambda h, r: (r, h)),
        scratch_shapes=[pltpu.VMEM((1, n), jnp.float32)],           # alpha_src row
        compiler_params=pltpu.CompilerParams(
            dimension_semantics=("parallel", "arbitrary")),
    )(xw,
      adj_i8,
      att_src.reshape(heads, 1, d_pad),
      att_dst.reshape(heads, 1, d_pad),
      bias.reshape(heads, 1, d_pad))

    if d_pad != d:
        out = out.reshape(n, heads, d_pad)[:, :, :d].reshape(n, heads * d)
    return out


def gat_forward(x, adj_i8, params):
    """GAT.forward: elu(conv1(x)) -> conv2."""
    h1 = gat_conv(x, adj_i8, params["w1"], params["a_src1"], params["a_dst1"],
                  params["b1"], heads=params["heads"], out_dim=params["hidden"],
                  apply_elu=True)
    out = gat_conv(h1, adj_i8, params["w2"], params["a_src2"], params["a_dst2"],
                   params["b2"], heads=1, out_dim=params["out_channels"],
                   apply_elu=False)
    return out


if __name__ == "__main__":
    n_nodes = 16
    in_channels = 16
    hidden = 128
    heads = 8
    out_channels = 8
    n_edges = 40

    keys = jax.random.split(jax.random.PRNGKey(0), 10)

    # node features and random edge_index [2, E]
    x = jax.random.normal(keys[0], (n_nodes, in_channels), jnp.float32)
    src = jax.random.randint(keys[1], (n_edges,), 0, n_nodes)
    dst = jax.random.randint(keys[2], (n_edges,), 0, n_nodes)

    # dense adjacency (int8): adj[i, j] = 1 iff edge j -> i ; self loops added
    # (GATConv default add_self_loops=True).
    adj = jnp.zeros((n_nodes, n_nodes), jnp.int8).at[dst, src].set(1)
    adj = jnp.maximum(adj, jnp.eye(n_nodes, dtype=jnp.int8))

    params = {
        "heads": heads,
        "hidden": hidden,
        "out_channels": out_channels,
        # conv1: GATConv(in_channels, 128, heads=8)
        "w1": 0.1 * jax.random.normal(keys[3], (in_channels, heads * hidden), jnp.float32),
        "a_src1": 0.1 * jax.random.normal(keys[4], (heads, hidden), jnp.float32),
        "a_dst1": 0.1 * jax.random.normal(keys[5], (heads, hidden), jnp.float32),
        "b1": jnp.zeros((heads, hidden), jnp.float32),   # bias over concat dim, per-head view
        # conv2: GATConv(128*8, out_channels, heads=1, concat=True)
        "w2": 0.1 * jax.random.normal(keys[6], (heads * hidden, out_channels), jnp.float32),
        "a_src2": 0.1 * jax.random.normal(keys[7], (1, out_channels), jnp.float32),
        "a_dst2": 0.1 * jax.random.normal(keys[8], (1, out_channels), jnp.float32),
        "b2": jnp.zeros((1, out_channels), jnp.float32),
    }

    out = jax.block_until_ready(gat_forward(x, adj, params))
    assert out.shape == (n_nodes, out_channels), out.shape
    assert jnp.all(jnp.isfinite(out))
    print("KERNEL_OK")
</pallas_src>

<mosaic_0001>
module attributes {stable_mosaic.version = 11 : i64} {
  func.func @_proj_kernel(%arg0: i32, %arg1: memref<16x16xf32, #tpu.memory_space<vmem>>, %arg2: memref<16x1024xf32, #tpu.memory_space<vmem>>, %arg3: memref<16x1024xf32, #tpu.memory_space<vmem>>) attributes {dimension_semantics = [#tpu.dimension_semantics<arbitrary>], iteration_bounds = array<i64: 1>, scalar_prefetch = 0 : i64, scratch_operands = 0 : i64, tpu.core_type = #tpu.core_type<tc>, window_params = [{transform_indices = @transform_0, window_bounds = array<i64: 16, 16>}, {transform_indices = @transform_1, window_bounds = array<i64: 16, 1024>}, {pipeline_mode = #tpu.pipeline_mode<synchronous>, transform_indices = @transform_2, window_bounds = array<i64: 16, 1024>}]} {
    %c0_i32 = arith.constant 0 : i32
    %0 = arith.cmpi eq, %arg0, %c0_i32 : i32
    %1 = arith.extui %0 : i1 to i32
    %c0_i32_0 = arith.constant 0 : i32
    %2 = arith.cmpi ne, %1, %c0_i32_0 : i32
    scf.if %2 {
      %cst_8 = arith.constant 0.000000e+00 : f32
      %11 = vector.broadcast %cst_8 : f32 to vector<16x1024xf32>
      %c0_9 = arith.constant 0 : index
      %c0_10 = arith.constant 0 : index
      %12 = vector.load %arg3[%c0_9, %c0_10] : memref<16x1024xf32, #tpu.memory_space<vmem>>, vector<16x1024xf32>
      tpu.vector_store %arg3[%c0_9, %c0_10], %11 {strides = array<i32>} : memref<16x1024xf32, #tpu.memory_space<vmem>>, vector<16x1024xf32>,
    } else {
    }
    %c0 = arith.constant 0 : index
    %c0_1 = arith.constant 0 : index
    %3 = vector.load %arg3[%c0, %c0_1] : memref<16x1024xf32, #tpu.memory_space<vmem>>, vector<16x1024xf32>
    %c0_2 = arith.constant 0 : index
    %c0_3 = arith.constant 0 : index
    %4 = vector.load %arg1[%c0_2, %c0_3] : memref<16x16xf32, #tpu.memory_space<vmem>>, vector<16x16xf32>
    %5 = arith.truncf %4 : vector<16x16xf32> to vector<16x16xbf16>
    %c0_4 = arith.constant 0 : index
    %c0_5 = arith.constant 0 : index
    %6 = vector.load %arg2[%c0_4, %c0_5] : memref<16x1024xf32, #tpu.memory_space<vmem>>, vector<16x1024xf32>
    %7 = arith.truncf %6 : vector<16x1024xf32> to vector<16x1024xbf16>
    %cst = arith.constant dense<0.000000e+00> : vector<16x1024xf32>
    %8 = tpu.matmul %5, %7, %cst {dimension_numbers = #tpu.dot_dimension_numbers<[1], [0], [0], [1], [0, 0, 1, 1], [], []>} : vector<16x16xbf16>, vector<16x1024xbf16>, vector<16x1024xf32> -> vector<16x1024xf32>
    %9 = arith.addf %3, %8 : vector<16x1024xf32>
    %c0_6 = arith.constant 0 : index
    %c0_7 = arith.constant 0 : index
    %10 = vector.load %arg3[%c0_6, %c0_7] : memref<16x1024xf32, #tpu.memory_space<vmem>>, vector<16x1024xf32>
    tpu.vector_store %arg3[%c0_6, %c0_7], %9 {strides = array<i32>} : memref<16x1024xf32, #tpu.memory_space<vmem>>, vector<16x1024xf32>,
    return
  }
  func.func @transform_0(%arg0: i32) -> (i32, i32) {
    %c0_i32 = arith.constant 0 : i32
    %c0_i32_0 = arith.constant 0 : i32
    return %c0_i32, %arg0 : i32, i32
  }
  func.func @transform_1(%arg0: i32) -> (i32, i32) {
    %c0_i32 = arith.constant 0 : i32
    %c0_i32_0 = arith.constant 0 : i32
    return %arg0, %c0_i32 : i32, i32
  }
  func.func @transform_2(%arg0: i32) -> (i32, i32) {
    %c0_i32 = arith.constant 0 : i32
    %c0_i32_0 = arith.constant 0 : i32
    %c0_i32_1 = arith.constant 0 : i32
    return %c0_i32, %c0_i32_0 : i32, i32
  }
}

</mosaic_0001>

<llo_original>
// kernel: tpu_custom_call.1
$region0: #{tpu_custom_call.1}
  #allocation0 [shape = 'u32[]', space=smem, size = 0x4, offset = 0x4, fixed_abs, tag = 'smem constant byte address 0x4 - core index']
  #allocation1 [shape = 'u32[144,128]{1,0:T(1,128)}', space=vmem, size = 0x12000, scoped, tag = 'internal scratch']
  %s0 = inlined_call_operand.hbm [shape: f32[16,16], index: 0, kind: input, shape index: {}]
  %s1 = inlined_call_operand.hbm [shape: f32[16,1024], index: 1, kind: input, shape index: {}]
  %s2 = inlined_call_operand.hbm [shape: f32[16,1024], index: 2, kind: output, shape index: {}]
  %s3 = sld [smem:[#allocation0]]
  $region30: #{tpu_custom_call.1} parent=0
    _
  %s5 = ssub.s32 1, %s3
  %s6 = scalar_select 0, %s5, %s3
  $region1: #{tpu_custom_call.1} parent=0
    #allocation2 [shape = 'u8[8192]{0}', space=vmem, size = 0x2000, scoped, tag = 'input window, operand 0, single buffered']
    #allocation3 [shape = 's32[1]{0}', space=sflag, size = 0x4, scoped, tag = 'scoped memory for tpu_custom_call.1']
    #allocation4 [shape = 's32[1]{0}', space=sflag, size = 0x4, scoped, tag = 'scoped memory for tpu_custom_call.1']
    #allocation5 [shape = 'u8[65536]{0}', space=vmem, size = 0x10000, scoped, tag = 'input window, operand 1, single buffered']
    #allocation6 [shape = 's32[1]{0}', space=sflag, size = 0x4, scoped, tag = 'scoped memory for tpu_custom_call.1']
    #allocation7 [shape = 'u8[65536]{0}', space=vmem, size = 0x10000, scoped, tag = 'output window, operand 0, single buffered']
    %7 = vsyncpa [#allocation3], 0
    %8 = vsyncpa [#allocation6], 0
    %9 = vsyncpa [#allocation4], 0
    // Predicated region
    $region2: #{tpu_custom_call.1} parent=1 // pred_check
      _
    $region3: #{tpu_custom_call.1} parent=1 // pred_check_branch
      %11 = sbr.rel (0) target = $region5
    $region4: #{tpu_custom_call.1} parent=1 // pred_region
      %s13 = ssub.s32 256, 256
      %14 = vsyncadd [#allocation3], %s13
      %s15 = sshll.u32 [#allocation2], 4
      %s16 = int_to_ptr.vmem [resolvable:$true] %s15
      %21 = dma.hbm_to_vmem [thread:$0]  %s0, 256, %s16, [#allocation3], 128, 128, 8
    $region5: #{tpu_custom_call.1} parent=1 // pred_fallthru
      _
    // Predicated region
    $region6: #{tpu_custom_call.1} parent=1 // pred_check
      _
    $region7: #{tpu_custom_call.1} parent=1 // pred_check_branch
      %23 = sbr.rel (0) target = $region9
    $region8: #{tpu_custom_call.1} parent=1 // pred_region
      %s25 = ssub.s32 2048, 2048
      %26 = vsyncadd [#allocation6], %s25
      %s27 = sshll.u32 [#allocation5], 4
      %s28 = int_to_ptr.vmem [resolvable:$true] %s27
      %33 = dma.hbm_to_vmem [thread:$0]  %s1, 2048, %s28, [#allocation6], 1024, 1024, 64
    $region9: #{tpu_custom_call.1} parent=1 // pred_fallthru
      _
    // Predicated region
    $region10: #{tpu_custom_call.1} parent=1 // pred_check
      _
    $region11: #{tpu_custom_call.1} parent=1 // pred_check_branch
      %35 = sbr.rel (0) target = $region13
    $region12: #{tpu_custom_call.1} parent=1 // pred_region
      %36 = dma.done [#allocation3], 256
    $region13: #{tpu_custom_call.1} parent=1 // pred_fallthru
      _
    // Predicated region
    $region14: #{tpu_custom_call.1} parent=1 // pred_check
      _
    $region15: #{tpu_custom_call.1} parent=1 // pred_check_branch
      %38 = sbr.rel (0) target = $region17
    $region16: #{tpu_custom_call.1} parent=1 // pred_region
      %39 = dma.done [#allocation6], 2048
    $region17: #{tpu_custom_call.1} parent=1 // pred_fallthru
      _
    %p41 = scmp.eq.s32.totalorder 0, 0
    // Predicated region
    $region18: #{tpu_custom_call.1} parent=1 // pred_check
      %p42 = pneg %p41
    $region19: #{tpu_custom_call.1} parent=1 // pred_check_branch
      %44 = sbr.rel (%p42) target = $region21
    $region20: #{tpu_custom_call.1} parent=1 // pred_region
      %45 = vst [vmem:[#allocation7] sm:$0xff] 0.0
      %46 = vst [vmem:[#allocation7 + $0x8] sm:$0xff] 0.0
      %47 = vst [vmem:[#allocation7 + $0x10] sm:$0xff] 0.0
      %48 = vst [vmem:[#allocation7 + $0x18] sm:$0xff] 0.0
      %49 = vst [vmem:[#allocation7 + $0x20] sm:$0xff] 0.0
      %50 = vst [vmem:[#allocation7 + $0x28] sm:$0xff] 0.0
      %51 = vst [vmem:[#allocation7 + $0x30] sm:$0xff] 0.0
      %52 = vst [vmem:[#allocation7 + $0x38] sm:$0xff] 0.0
      %53 = vst [vmem:[#allocation7 + $0x40] sm:$0xff] 0.0
      %54 = vst [vmem:[#allocation7 + $0x48] sm:$0xff] 0.0
      %55 = vst [vmem:[#allocation7 + $0x50] sm:$0xff] 0.0
      %56 = vst [vmem:[#allocation7 + $0x58] sm:$0xff] 0.0
      %57 = vst [vmem:[#allocation7 + $0x60] sm:$0xff] 0.0
      %58 = vst [vmem:[#allocation7 + $0x68] sm:$0xff] 0.0
      %59 = vst [vmem:[#allocation7 + $0x70] sm:$0xff] 0.0
      %60 = vst [vmem:[#allocation7 + $0x78] sm:$0xff] 0.0
    $region21: #{tpu_custom_call.1} parent=1 // pred_fallthru
      _
    %v61 = vld [vmem:[#allocation7] sm:$0xff]
    %v62 = vld [vmem:[#allocation7 + $0x8] sm:$0xff]
    %v63 = vld [vmem:[#allocation7 + $0x10] sm:$0xff]
    %v64 = vld [vmem:[#allocation7 + $0x18] sm:$0xff]
    %v65 = vld [vmem:[#allocation7 + $0x20] sm:$0xff]
    %v66 = vld [vmem:[#allocation7 + $0x28] sm:$0xff]
    %v67 = vld [vmem:[#allocation7 + $0x30] sm:$0xff]
    %v68 = vld [vmem:[#allocation7 + $0x38] sm:$0xff]
    %v69 = vld [vmem:[#allocation7 + $0x40] sm:$0xff]
    %v70 = vld [vmem:[#allocation7 + $0x48] sm:$0xff]
    %v71 = vld [vmem:[#allocation7 + $0x50] sm:$0xff]
    %v72 = vld [vmem:[#allocation7 + $0x58] sm:$0xff]
    %v73 = vld [vmem:[#allocation7 + $0x60] sm:$0xff]
    %v74 = vld [vmem:[#allocation7 + $0x68] sm:$0xff]
    %v75 = vld [vmem:[#allocation7 + $0x70] sm:$0xff]
    %v76 = vld [vmem:[#allocation7 + $0x78] sm:$0xff]
    %v77 = vld [vmem:[#allocation2] sm:$0xff]
    %v78 = vld [vmem:[#allocation2 + $0x8] sm:$0xff]
    %v79 = vpack.c.bf16 %v78, %v77
    %v80 = vld [vmem:[#allocation5] sm:$0xff]
    %v81 = vld [vmem:[#allocation5 + $0x8] sm:$0xff]
    %v82 = vld [vmem:[#allocation5 + $0x10] sm:$0xff]
    %v83 = vld [vmem:[#allocation5 + $0x18] sm:$0xff]
    %v84 = vld [vmem:[#allocation5 + $0x20] sm:$0xff]
    %v85 = vld [vmem:[#allocation5 + $0x28] sm:$0xff]
    %v86 = vld [vmem:[#allocation5 + $0x30] sm:$0xff]
    %v87 = vld [vmem:[#allocation5 + $0x38] sm:$0xff]
    %v88 = vld [vmem:[#allocation5 + $0x40] sm:$0xff]
    %v89 = vld [vmem:[#allocation5 + $0x48] sm:$0xff]
    %v90 = vld [vmem:[#allocation5 + $0x50] sm:$0xff]
    %v91 = vld [vmem:[#allocation5 + $0x58] sm:$0xff]
    %v92 = vld [vmem:[#allocation5 + $0x60] sm:$0xff]
    %v93 = vld [vmem:[#allocation5 + $0x68] sm:$0xff]
    %v94 = vld [vmem:[#allocation5 + $0x70] sm:$0xff]
    %v95 = vld [vmem:[#allocation5 + $0x78] sm:$0xff]
    %v96 = vpack.c.bf16 %v88, %v80
    %v97 = vpack.c.bf16 %v89, %v81
    %v98 = vpack.c.bf16 %v90, %v82
    %v99 = vpack.c.bf16 %v91, %v83
    %v100 = vpack.c.bf16 %v92, %v84
    %v101 = vpack.c.bf16 %v93, %v85
    %v102 = vpack.c.bf16 %v94, %v86
    %v103 = vpack.c.bf16 %v95, %v87
    %vm104 = vcmask 130048
    %v106 = vsel %vm104, %v79, 0
    %108 = vmatprep.subr.bf16.mxu0 %v97
    %109 = vmatpush1.bf16.msra.mxu0 %v96
    %110 = vmatprep.subr.bf16.mxu0 0
    %111 = vmatpush1.bf16.msra.mxu0 0
    %112 = vmatprep.subr.bf16.mxu0 0
    %113 = vmatpush1.bf16.msra.mxu0 0
    %114 = vmatprep.subr.bf16.mxu0 0
    %115 = vmatpush1.bf16.msra.mxu0 0
    %116 = vmatprep.subr.bf16.mxu0 0
    %117 = vmatpush1.bf16.msra.mxu0 0
    %118 = vmatprep.subr.bf16.mxu0 0
    %119 = vmatpush1.bf16.msra.mxu0 0
    %120 = vmatprep.subr.bf16.mxu0 0
    %121 = vmatpush1.bf16.msra.mxu0 0
    %122 = vmatprep.subr.bf16.mxu0 0
    %123 = vmatpush1.bf16.msra.mxu0 0
    %124 = vmatprep.subr.bf16.mxu0 0
    %125 = vmatpush1.bf16.msra.mxu0 0
    %126 = vmatprep.subr.bf16.mxu0 0
    %127 = vmatpush1.bf16.msra.mxu0 0
    %128 = vmatprep.subr.bf16.mxu0 0
    %129 = vmatpush1.bf16.msra.mxu0 0
    %130 = vmatprep.subr.bf16.mxu0 0
    %131 = vmatpush1.bf16.msra.mxu0 0
    %132 = vmatprep.subr.bf16.mxu0 0
    %133 = vmatpush1.bf16.msra.mxu0 0
    %134 = vmatprep.subr.bf16.mxu0 0
    %135 = vmatpush1.bf16.msra.mxu0 0
    %136 = vmatprep.subr.bf16.mxu0 0
    %137 = vmatpush1.bf16.msra.mxu0 0
    %138 = vmatprep.subr.bf16.mxu0 0
    %139 = vmatpush1.bf16.msra.mxu0 0
    %140 = vmatprep.mubr.bf16.mxu0 0
    %141 = vmatmul.mubr.bf16.gmra.mrb[0].mxu0 %v106
    %v142 = vpop.f32.mrb[0].mxu0
    %v143 = vadd.f32 0.0, %v142
    %v144 = vpop.f32.mrb[0].mxu0
    %v145 = vadd.f32 0.0, %v144
    %v146 = vpop.f32.mrb[0].mxu0
    %v147 = vadd.f32 0.0, %v146
    %v148 = vpop.f32.mrb[0].mxu0
    %v149 = vadd.f32 0.0, %v148
    %150 = vdwg.mxu0
    %151 = vmatprep.subr.bf16.mxu0 %v99
    %152 = vmatpush1.bf16.msra.mxu0 %v98
    %153 = vmatprep.subr.bf16.mxu0 0
    %154 = vmatpush1.bf16.msra.mxu0 0
    %155 = vmatprep.subr.bf16.mxu0 0
    %156 = vmatpush1.bf16.msra.mxu0 0
    %157 = vmatprep.subr.bf16.mxu0 0
    %158 = vmatpush1.bf16.msra.mxu0 0
    %159 = vmatprep.subr.bf16.mxu0 0
    %160 = vmatpush1.bf16.msra.mxu0 0
    %161 = vmatprep.subr.bf16.mxu0 0
    %162 = vmatpush1.bf16.msra.mxu0 0
    %163 = vmatprep.subr.bf16.mxu0 0
    %164 = vmatpush1.bf16.msra.mxu0 0
    %165 = vmatprep.subr.bf16.mxu0 0
    %166 = vmatpush1.bf16.msra.mxu0 0
    %167 = vmatprep.subr.bf16.mxu0 0
    %168 = vmatpush1.bf16.msra.mxu0 0
    %169 = vmatprep.subr.bf16.mxu0 0
    %170 = vmatpush1.bf16.msra.mxu0 0
    %171 = vmatprep.subr.bf16.mxu0 0
    %172 = vmatpush1.bf16.msra.mxu0 0
    %173 = vmatprep.subr.bf16.mxu0 0
    %174 = vmatpush1.bf16.msra.mxu0 0
    %175 = vmatprep.subr.bf16.mxu0 0
    %176 = vmatpush1.bf16.msra.mxu0 0
    %177 = vmatprep.subr.bf16.mxu0 0
    %178 = vmatpush1.bf16.msra.mxu0 0
    %179 = vmatprep.subr.bf16.mxu0 0
    %180 = vmatpush1.bf16.msra.mxu0 0
    %181 = vmatprep.subr.bf16.mxu0 0
    %182 = vmatpush1.bf16.msra.mxu0 0
    %183 = vmatprep.mubr.bf16.mxu0 0
    %184 = vmatmul.mubr.bf16.gmra.mrb[0].mxu0 %v106
    %v185 = vpop.f32.mrb[0].mxu0
    %v186 = vadd.f32 0.0, %v185
    %v187 = vpop.f32.mrb[0].mxu0
    %v188 = vadd.f32 0.0, %v187
    %v189 = vpop.f32.mrb[0].mxu0
    %v190 = vadd.f32 0.0, %v189
    %v191 = vpop.f32.mrb[0].mxu0
    %v192 = vadd.f32 0.0, %v191
    %193 = vdwg.mxu0
    %194 = vmatprep.subr.bf16.mxu0 %v101
    %195 = vmatpush1.bf16.msra.mxu0 %v100
    %196 = vmatprep.subr.bf16.mxu0 0
    %197 = vmatpush1.bf16.msra.mxu0 0
    %198 = vmatprep.subr.bf16.mxu0 0
    %199 = vmatpush1.bf16.msra.mxu0 0
    %200 = vmatprep.subr.bf16.mxu0 0
    %201 = vmatpush1.bf16.msra.mxu0 0
    %202 = vmatprep.subr.bf16.mxu0 0
    %203 = vmatpush1.bf16.msra.mxu0 0
    %204 = vmatprep.subr.bf16.mxu0 0
    %205 = vmatpush1.bf16.msra.mxu0 0
    %206 = vmatprep.subr.bf16.mxu0 0
    %207 = vmatpush1.bf16.msra.mxu0 0
    %208 = vmatprep.subr.bf16.mxu0 0
    %209 = vmatpush1.bf16.msra.mxu0 0
    %210 = vmatprep.subr.bf16.mxu0 0
    %211 = vmatpush1.bf16.msra.mxu0 0
    %212 = vmatprep.subr.bf16.mxu0 0
    %213 = vmatpush1.bf16.msra.mxu0 0
    %214 = vmatprep.subr.bf16.mxu0 0
    %215 = vmatpush1.bf16.msra.mxu0 0
    %216 = vmatprep.subr.bf16.mxu0 0
    %217 = vmatpush1.bf16.msra.mxu0 0
    %218 = vmatprep.subr.bf16.mxu0 0
    %219 = vmatpush1.bf16.msra.mxu0 0
    %220 = vmatprep.subr.bf16.mxu0 0
    %221 = vmatpush1.bf16.msra.mxu0 0
    %222 = vmatprep.subr.bf16.mxu0 0
    %223 = vmatpush1.bf16.msra.mxu0 0
    %224 = vmatprep.subr.bf16.mxu0 0
    %225 = vmatpush1.bf16.msra.mxu0 0
    %226 = vmatprep.mubr.bf16.mxu0 0
    %227 = vmatmul.mubr.bf16.gmra.mrb[0].mxu0 %v106
    %v228 = vpop.f32.mrb[0].mxu0
    %v229 = vadd.f32 0.0, %v228
    %v230 = vpop.f32.mrb[0].mxu0
    %v231 = vadd.f32 0.0, %v230
    %v232 = vpop.f32.mrb[0].mxu0
    %v233 = vadd.f32 0.0, %v232
    %v234 = vpop.f32.mrb[0].mxu0
    %v235 = vadd.f32 0.0, %v234
    %236 = vdwg.mxu0
    %237 = vmatprep.subr.bf16.mxu0 %v103
    %238 = vmatpush1.bf16.msra.mxu0 %v102
    %239 = vmatprep.subr.bf16.mxu0 0
    %240 = vmatpush1.bf16.msra.mxu0 0
    %241 = vmatprep.subr.bf16.mxu0 0
    %242 = vmatpush1.bf16.msra.mxu0 0
    %243 = vmatprep.subr.bf16.mxu0 0
    %244 = vmatpush1.bf16.msra.mxu0 0
    %245 = vmatprep.subr.bf16.mxu0 0
    %246 = vmatpush1.bf16.msra.mxu0 0
    %247 = vmatprep.subr.bf16.mxu0 0
    %248 = vmatpush1.bf16.msra.mxu0 0
    %249 = vmatprep.subr.bf16.mxu0 0
    %250 = vmatpush1.bf16.msra.mxu0 0
    %251 = vmatprep.subr.bf16.mxu0 0
    %252 = vmatpush1.bf16.msra.mxu0 0
    %253 = vmatprep.subr.bf16.mxu0 0
    %254 = vmatpush1.bf16.msra.mxu0 0
    %255 = vmatprep.subr.bf16.mxu0 0
    %256 = vmatpush1.bf16.msra.mxu0 0
    %257 = vmatprep.subr.bf16.mxu0 0
    %258 = vmatpush1.bf16.msra.mxu0 0
    %259 = vmatprep.subr.bf16.mxu0 0
    %260 = vmatpush1.bf16.msra.mxu0 0
    %261 = vmatprep.subr.bf16.mxu0 0
    %262 = vmatpush1.bf16.msra.mxu0 0
    %263 = vmatprep.subr.bf16.mxu0 0
    %264 = vmatpush1.bf16.msra.mxu0 0
    %265 = vmatprep.subr.bf16.mxu0 0
    %266 = vmatpush1.bf16.msra.mxu0 0
    %267 = vmatprep.subr.bf16.mxu0 0
    %268 = vmatpush1.bf16.msra.mxu0 0
    %269 = vmatprep.mubr.bf16.mxu0 0
    %270 = vmatmul.mubr.bf16.gmra.mrb[0].mxu0 %v106
    %v271 = vpop.f32.mrb[0].mxu0
    %v272 = vadd.f32 0.0, %v271
    %v273 = vpop.f32.mrb[0].mxu0
    %v274 = vadd.f32 0.0, %v273
    %v275 = vpop.f32.mrb[0].mxu0
    %v276 = vadd.f32 0.0, %v275
    %v277 = vpop.f32.mrb[0].mxu0
    %v278 = vadd.f32 0.0, %v277
    %279 = vdwg.mxu0
    %v280 = vadd.f32 %v61, %v143
    %v281 = vadd.f32 %v62, %v145
    %v282 = vadd.f32 %v63, %v186
    %v283 = vadd.f32 %v64, %v188
    %v284 = vadd.f32 %v65, %v229
    %v285 = vadd.f32 %v66, %v231
    %v286 = vadd.f32 %v67, %v272
    %v287 = vadd.f32 %v68, %v274
    %v288 = vadd.f32 %v69, %v147
    %v289 = vadd.f32 %v70, %v149
    %v290 = vadd.f32 %v71, %v190
    %v291 = vadd.f32 %v72, %v192
    %v292 = vadd.f32 %v73, %v233
    %v293 = vadd.f32 %v74, %v235
    %v294 = vadd.f32 %v75, %v276
    %v295 = vadd.f32 %v76, %v278
    %296 = vst [vmem:[#allocation7] sm:$0xff] %v280
    %297 = vst [vmem:[#allocation7 + $0x8] sm:$0xff] %v281
    %298 = vst [vmem:[#allocation7 + $0x10] sm:$0xff] %v282
    %299 = vst [vmem:[#allocation7 + $0x18] sm:$0xff] %v283
    %300 = vst [vmem:[#allocation7 + $0x20] sm:$0xff] %v284
    %301 = vst [vmem:[#allocation7 + $0x28] sm:$0xff] %v285
    %302 = vst [vmem:[#allocation7 + $0x30] sm:$0xff] %v286
    %303 = vst [vmem:[#allocation7 + $0x38] sm:$0xff] %v287
    %304 = vst [vmem:[#allocation7 + $0x40] sm:$0xff] %v288
    %305 = vst [vmem:[#allocation7 + $0x48] sm:$0xff] %v289
    %306 = vst [vmem:[#allocation7 + $0x50] sm:$0xff] %v290
    %307 = vst [vmem:[#allocation7 + $0x58] sm:$0xff] %v291
    %308 = vst [vmem:[#allocation7 + $0x60] sm:$0xff] %v292
    %309 = vst [vmem:[#allocation7 + $0x68] sm:$0xff] %v293
    %310 = vst [vmem:[#allocation7 + $0x70] sm:$0xff] %v294
    %311 = vst [vmem:[#allocation7 + $0x78] sm:$0xff] %v295
    // Predicated region
    $region22: #{tpu_custom_call.1} parent=1 // pred_check
      _
    $region23: #{tpu_custom_call.1} parent=1 // pred_check_branch
      %313 = sbr.rel (0) target = $region25
    $region24: #{tpu_custom_call.1} parent=1 // pred_region
      %s315 = ssub.s32 2048, 2048
      %316 = vsyncadd [#allocation4], %s315
      %s317 = sshll.u32 [#allocation7], 4
      %s318 = int_to_ptr.vmem [resolvable:$true] %s317
      %323 = dma.vmem_to_hbm [thread:$0]  %s318, 2048, %s2, [#allocation4], 1024, 1024, 64
    $region25: #{tpu_custom_call.1} parent=1 // pred_fallthru
      _
    // Predicated region
    $region26: #{tpu_custom_call.1} parent=1 // pred_check
      _
    $region27: #{tpu_custom_call.1} parent=1 // pred_check_branch
      %325 = sbr.rel (0) target = $region29
    $region28: #{tpu_custom_call.1} parent=1 // pred_region
      %326 = dma.done [#allocation4], 2048
    $region29: #{tpu_custom_call.1} parent=1 // pred_fallthru
      _
    %327 = vsyncpa [#allocation3], 1
    %328 = vsyncpa [#allocation6], 1
    %329 = vsyncpa [#allocation4], 1

</llo_original>
